<compile_context>
chip_gen: v7x
topology: tpu7x:2x2x1
jax: 0.10.0
libtpu: 0.0.40
codegen_flags: <defaults>
</compile_context>

<pallas_src>
import functools

import jax
import jax.numpy as jnp
from jax.experimental import pallas as pl
from jax.experimental.pallas import tpu as pltpu

IGNORE_INDEX = 255
GAMMA = 2.0         # hard-coded as (1 - pt)**2 in the kernel
ALPHA = 0.25
SMOOTH = 1.0
FOCAL_WEIGHT = 0.75
LOSS_WEIGHT = 1.0


def _focal_dice_kernel(pred_ref, tgt_ref, focal_ref, dice_ref,
                       num_scr, den_scr, *, num_classes):
    """Processes one (batch n, HW tile h) block.

    pred_ref : (1, C, T) logits                     (VMEM, auto-pipelined)
    tgt_ref  : (1, 1, T) int32 labels               (VMEM, auto-pipelined)
    focal_ref: (1, 1, 1) per-batch focal-sum partial (resident across h)
    dice_ref : (1, 1, 1) per-batch dice partial      (written on last h tile)
    num_scr  : (C, 1) f32 scratch — running sum of p2 * onehot * valid
    den_scr  : (C, 1) f32 scratch — running sum of p2^2 + onehot
    """
    h = pl.program_id(1)
    last_h = pl.num_programs(1) - 1

    @pl.when(h == 0)
    def _():
        focal_ref[...] = jnp.zeros_like(focal_ref)
        num_scr[...] = jnp.zeros_like(num_scr)
        den_scr[...] = jnp.zeros_like(den_scr)

    x = pred_ref[0].astype(jnp.float32)   # (C, T) logits (cast in VMEM)
    tgt = tgt_ref[0]                      # (1, T) int32
    C, T = x.shape

    # --- softmax #1 over the class (sublane) axis ---
    m1 = jnp.max(x, axis=0, keepdims=True)
    e1 = jnp.exp(x - m1)
    p1 = e1 / jnp.sum(e1, axis=0, keepdims=True)          # in [0, 1]

    # --- masks (computed once; (1,T) rows broadcast implicitly to (C,T)) ---
    cls_idx = jax.lax.broadcasted_iota(jnp.int32, (C, T), 0)
    not_ignored = tgt != IGNORE_INDEX                     # (1, T) bool
    valid_pix = jnp.logical_and(tgt >= 0, not_ignored)    # (1, T) bool
    pos = jnp.logical_and(cls_idx == tgt, valid_pix)      # (C, T) one-hot mask

    # --- focal term: BCE-with-logits applied to p1 (the module's quirk).
    #     Because p1 >= 0 this is exactly bce = -log(pt) with
    #     pt = sigmoid(p1) for positives, 1 - sigmoid(p1) for negatives;
    #     gamma = 2 -> (1 - pt)^2. ---
    ex = jnp.exp(-p1)                      # one EUP exp, reused below
    sig = 1.0 / (1.0 + ex)                 # sigmoid(p1)
    pt = jnp.where(pos, sig, 1.0 - sig)
    bce = -jnp.log(pt)                     # one EUP log
    one_m_pt = 1.0 - pt
    alpha_w = jnp.where(pos, ALPHA, 1.0 - ALPHA)
    l_focal = (one_m_pt * one_m_pt) * bce * alpha_w
    focal_ref[...] += jnp.reshape(jnp.sum(l_focal), (1, 1, 1))

    # --- softmax #2 (applied to p1, as in the module).  p1 in [0,1], so no
    #     max-subtraction is needed, and exp(p1) == 1/exp(-p1) reuses `ex`.
    #     NOTE: only safe because p1 is already a softmax output. ---
    e2 = 1.0 / ex
    p2 = e2 / jnp.sum(e2, axis=0, keepdims=True)

    # --- dice partial sums (one-hot uses clamped labels; onehot^2 == onehot) ---
    oh_mask = cls_idx == jnp.clip(tgt, 0, num_classes - 1)       # (C, T) bool
    num_scr[...] += jnp.sum(
        jnp.where(jnp.logical_and(oh_mask, not_ignored), p2, 0.0),
        axis=1, keepdims=True)
    den_scr[...] += jnp.sum(
        p2 * p2 + jnp.where(oh_mask, 1.0, 0.0),
        axis=1, keepdims=True)

    @pl.when(h == last_h)
    def _():
        num = 2.0 * num_scr[...] + SMOOTH          # (C, 1)
        den = den_scr[...] + SMOOTH                # (C, 1)
        dice_ref[...] = jnp.reshape(jnp.sum(1.0 - num / den), (1, 1, 1))


def _choose_hw_tile(hw, max_lanes):
    """Largest multiple of 128 that divides hw and is <= max_lanes.

    If hw is not a multiple of 128, fall back to a single full-extent block
    (allowed because the block then equals the full array dim).
    """
    if hw % 128 != 0:
        return hw
    t = min(max_lanes, hw)
    t -= t % 128
    t = max(t, 128)
    while hw % t != 0:
        t -= 128
    return t


@functools.partial(jax.jit, static_argnames=("max_tile_lanes",))
def focal_dice_loss(pred, target, max_tile_lanes=8192):
    """pred: (N, C, H, W) float logits, target: (N, H, W) int labels."""
    N, C, H, W = pred.shape
    HW = H * W
    t_hw = _choose_hw_tile(HW, max_tile_lanes)
    n_tiles = HW // t_hw

    # Keep pred at its native dtype on the wire (bf16 stays bf16); the kernel
    # casts to f32 after the load.
    pred_r = pred.reshape(N, C, HW)
    tgt = target.reshape(N, 1, HW).astype(jnp.int32)

    kernel = functools.partial(_focal_dice_kernel, num_classes=C)

    focal_part, dice_part = pl.pallas_call(
        kernel,
        grid=(N, n_tiles),
        in_specs=[
            pl.BlockSpec((1, C, t_hw), lambda n, h: (n, 0, h)),
            pl.BlockSpec((1, 1, t_hw), lambda n, h: (n, 0, h)),
        ],
        out_specs=[
            pl.BlockSpec((1, 1, 1), lambda n, h: (n, 0, 0)),
            pl.BlockSpec((1, 1, 1), lambda n, h: (n, 0, 0)),
        ],
        out_shape=[
            jax.ShapeDtypeStruct((N, 1, 1), jnp.float32),   # per-batch focal sum
            jax.ShapeDtypeStruct((N, 1, 1), jnp.float32),   # per-batch dice sum
        ],
        scratch_shapes=[
            pltpu.VMEM((C, 1), jnp.float32),   # dice numerator partials
            pltpu.VMEM((C, 1), jnp.float32),   # dice denominator partials
        ],
        compiler_params=pltpu.CompilerParams(
            dimension_semantics=("parallel", "arbitrary")),
    )(pred_r, tgt)

    focal_sum = jnp.sum(focal_part)
    dice_sum = jnp.sum(dice_part)
    loss_focal = FOCAL_WEIGHT * LOSS_WEIGHT * (focal_sum / (N * C * HW))
    loss_dice = (1.0 - FOCAL_WEIGHT) * LOSS_WEIGHT * (dice_sum / (N * C))
    return loss_focal + loss_dice


def focal_dice_loss_ref(pred, target):
    """Pure-JAX reference of the PyTorch forward (for a sanity check)."""
    N, C, H, W = pred.shape
    pred = pred.astype(jnp.float32)
    p1 = jax.nn.softmax(pred, axis=1)

    cls = jnp.arange(C, dtype=jnp.int32)[None, :, None, None]
    valid = jnp.logical_and(target >= 0, target != IGNORE_INDEX)[:, None]
    t = jnp.where(jnp.logical_and(target[:, None] == cls, valid), 1.0, 0.0)

    bce = jnp.maximum(p1, 0.0) - p1 * t + jnp.log1p(jnp.exp(-jnp.abs(p1)))
    pt = jnp.exp(-bce)
    l = (1.0 - pt) ** 2 * bce * (ALPHA * t + (1.0 - ALPHA) * (1.0 - t))
    loss_focal = FOCAL_WEIGHT * LOSS_WEIGHT * jnp.mean(l)

    p2 = jax.nn.softmax(p1, axis=1)
    oh = (jnp.clip(target, 0, C - 1)[:, None] == cls).astype(jnp.float32)
    vm = (target != IGNORE_INDEX).astype(jnp.float32)[:, None]
    num = 2.0 * jnp.sum(p2 * oh * vm, axis=(2, 3)) + SMOOTH
    den = jnp.sum(p2 * p2 + oh * oh, axis=(2, 3)) + SMOOTH
    dice = 1.0 - num / den                                  # (N, C)
    loss_dice = (1.0 - FOCAL_WEIGHT) * LOSS_WEIGHT * (
        jnp.sum(jnp.mean(dice, axis=0)) / C)
    return loss_focal + loss_dice


if __name__ == "__main__":
    key = jax.random.PRNGKey(0)
    k1, k2 = jax.random.split(key)

    N, C, H, W = 2, 4, 16, 16
    pred = jax.random.normal(k1, (N, C, H, W), dtype=jnp.float32)
    raw = jax.random.randint(k2, (N, H, W), 0, C + 1)
    # map class index C to the ignore label to exercise ignore_index handling
    target = jnp.where(raw == C, IGNORE_INDEX, raw).astype(jnp.int32)

    # max_tile_lanes=128 forces multiple HW tiles (256 / 128 = 2) so the
    # tile-accumulation / finalize path is exercised even at this toy size.
    out = focal_dice_loss(pred, target, max_tile_lanes=128)
    jax.block_until_ready(out)

    ref = focal_dice_loss_ref(pred, target)
    assert jnp.allclose(out, ref, rtol=1e-4, atol=1e-5), (out, ref)

    print("KERNEL_OK")
</pallas_src>

<mosaic_0001>
module attributes {stable_mosaic.version = 11 : i64} {
  func.func @_focal_dice_kernel(%arg0: i32, %arg1: i32, %arg2: memref<1x4x128xf32, #tpu.memory_space<vmem>>, %arg3: memref<1x1x128xi32, #tpu.memory_space<vmem>>, %arg4: memref<1x1x1xf32, #tpu.memory_space<vmem>>, %arg5: memref<1x1x1xf32, #tpu.memory_space<vmem>>, %arg6: memref<4x1xf32, #tpu.memory_space<vmem>>, %arg7: memref<4x1xf32, #tpu.memory_space<vmem>>) attributes {dimension_semantics = [#tpu.dimension_semantics<parallel>, #tpu.dimension_semantics<arbitrary>], iteration_bounds = array<i64: 2, 2>, scalar_prefetch = 0 : i64, scratch_operands = 2 : i64, tpu.core_type = #tpu.core_type<tc>, window_params = [{transform_indices = @transform_0, window_bounds = array<i64: 1, 4, 128>}, {transform_indices = @transform_1, window_bounds = array<i64: 1, 1, 128>}, {transform_indices = @transform_2, window_bounds = array<i64: 1, 1, 1>}, {transform_indices = @transform_3, window_bounds = array<i64: 1, 1, 1>}]} {
    %c0_i32 = arith.constant 0 : i32
    %0 = arith.cmpi eq, %arg1, %c0_i32 : i32
    %1 = arith.extui %0 : i1 to i32
    %c0_i32_0 = arith.constant 0 : i32
    %2 = arith.cmpi ne, %1, %c0_i32_0 : i32
    scf.if %2 {
      %cst_40 = arith.constant 0.000000e+00 : f32
      %89 = vector.broadcast %cst_40 : f32 to vector<1x1x1xf32>
      %c0_41 = arith.constant 0 : index
      %c0_42 = arith.constant 0 : index
      %c0_43 = arith.constant 0 : index
      %90 = vector.load %arg4[%c0_41, %c0_42, %c0_43] : memref<1x1x1xf32, #tpu.memory_space<vmem>>, vector<1x1x1xf32>
      tpu.vector_store %arg4[%c0_41, %c0_42, %c0_43], %89 {strides = array<i32>} : memref<1x1x1xf32, #tpu.memory_space<vmem>>, vector<1x1x1xf32>,
      %cst_44 = arith.constant 0.000000e+00 : f32
      %91 = vector.broadcast %cst_44 : f32 to vector<4x1xf32>
      %c0_45 = arith.constant 0 : index
      %c0_46 = arith.constant 0 : index
      %92 = vector.load %arg6[%c0_45, %c0_46] : memref<4x1xf32, #tpu.memory_space<vmem>>, vector<4x1xf32>
      tpu.vector_store %arg6[%c0_45, %c0_46], %91 {strides = array<i32>} : memref<4x1xf32, #tpu.memory_space<vmem>>, vector<4x1xf32>,
      %cst_47 = arith.constant 0.000000e+00 : f32
      %93 = vector.broadcast %cst_47 : f32 to vector<4x1xf32>
      %c0_48 = arith.constant 0 : index
      %c0_49 = arith.constant 0 : index
      %94 = vector.load %arg7[%c0_48, %c0_49] : memref<4x1xf32, #tpu.memory_space<vmem>>, vector<4x1xf32>
      tpu.vector_store %arg7[%c0_48, %c0_49], %93 {strides = array<i32>} : memref<4x1xf32, #tpu.memory_space<vmem>>, vector<4x1xf32>,
    } else {
    }
    %c0 = arith.constant 0 : index
    %c0_1 = arith.constant 0 : index
    %c0_2 = arith.constant 0 : index
    %3 = vector.load %arg2[%c0, %c0_1, %c0_2] : memref<1x4x128xf32, #tpu.memory_space<vmem>>, vector<1x4x128xf32>
    %4 = vector.shape_cast %3 : vector<1x4x128xf32> to vector<4x128xf32>
    %c0_3 = arith.constant 0 : index
    %c0_4 = arith.constant 0 : index
    %c0_5 = arith.constant 0 : index
    %5 = vector.load %arg3[%c0_3, %c0_4, %c0_5] : memref<1x1x128xi32, #tpu.memory_space<vmem>>, vector<1x1x128xi32>
    %6 = vector.shape_cast %5 : vector<1x1x128xi32> to vector<1x128xi32>
    %cst = arith.constant dense<0xFF800000> : vector<128xf32>
    %7 = vector.multi_reduction <maximumf>, %4, %cst [0] : vector<4x128xf32> to vector<128xf32>
    %8 = vector.shape_cast %7 : vector<128xf32> to vector<1x128xf32>
    %9 = vector.broadcast %8 : vector<1x128xf32> to vector<4x128xf32>
    %10 = arith.subf %4, %9 : vector<4x128xf32>
    %11 = math.exp %10 : vector<4x128xf32>
    %cst_6 = arith.constant dense<0.000000e+00> : vector<128xf32>
    %12 = vector.multi_reduction <add>, %11, %cst_6 [0] : vector<4x128xf32> to vector<128xf32>
    %13 = vector.shape_cast %12 : vector<128xf32> to vector<1x128xf32>
    %14 = vector.broadcast %13 : vector<1x128xf32> to vector<4x128xf32>
    %15 = arith.divf %11, %14 : vector<4x128xf32>
    %16 = tpu.iota {dimensions = array<i32: 0>} : vector<4x128xi32>
    %c255_i32 = arith.constant 255 : i32
    %17 = vector.broadcast %c255_i32 : i32 to vector<1x128xi32>
    %18 = arith.cmpi ne, %6, %17 : vector<1x128xi32>
    %c0_i32_7 = arith.constant 0 : i32
    %19 = vector.broadcast %c0_i32_7 : i32 to vector<1x128xi32>
    %20 = arith.cmpi sge, %6, %19 : vector<1x128xi32>
    %21 = arith.andi %20, %18 : vector<1x128xi1>
    %22 = vector.broadcast %6 : vector<1x128xi32> to vector<4x128xi32>
    %23 = arith.cmpi eq, %16, %22 : vector<4x128xi32>
    %24 = vector.broadcast %21 : vector<1x128xi1> to vector<4x128xi1>
    %25 = arith.andi %23, %24 : vector<4x128xi1>
    %cst_8 = arith.constant 0.000000e+00 : f32
    %26 = vector.broadcast %cst_8 : f32 to vector<4x128xf32>
    %27 = arith.subf %26, %15 : vector<4x128xf32>
    %28 = math.exp %27 : vector<4x128xf32>
    %cst_9 = arith.constant 1.000000e+00 : f32
    %29 = vector.broadcast %cst_9 : f32 to vector<4x128xf32>
    %30 = arith.addf %29, %28 : vector<4x128xf32>
    %cst_10 = arith.constant 1.000000e+00 : f32
    %31 = vector.broadcast %cst_10 : f32 to vector<4x128xf32>
    %32 = arith.divf %31, %30 : vector<4x128xf32>
    %cst_11 = arith.constant 1.000000e+00 : f32
    %33 = vector.broadcast %cst_11 : f32 to vector<4x128xf32>
    %34 = arith.subf %33, %32 : vector<4x128xf32>
    %35 = arith.select %25, %32, %34 : vector<4x128xi1>, vector<4x128xf32>
    %36 = math.log %35 : vector<4x128xf32>
    %cst_12 = arith.constant 0.000000e+00 : f32
    %37 = vector.broadcast %cst_12 : f32 to vector<4x128xf32>
    %38 = arith.subf %37, %36 : vector<4x128xf32>
    %cst_13 = arith.constant 1.000000e+00 : f32
    %39 = vector.broadcast %cst_13 : f32 to vector<4x128xf32>
    %40 = arith.subf %39, %35 : vector<4x128xf32>
    %cst_14 = arith.constant 2.500000e-01 : f32
    %cst_15 = arith.constant 7.500000e-01 : f32
    %41 = vector.broadcast %cst_14 : f32 to vector<4x128xf32>
    %42 = vector.broadcast %cst_15 : f32 to vector<4x128xf32>
    %43 = arith.select %25, %41, %42 : vector<4x128xi1>, vector<4x128xf32>
    %44 = arith.mulf %40, %40 : vector<4x128xf32>
    %45 = arith.mulf %44, %38 : vector<4x128xf32>
    %46 = arith.mulf %45, %43 : vector<4x128xf32>
    %c0_16 = arith.constant 0 : index
    %c0_17 = arith.constant 0 : index
    %c0_18 = arith.constant 0 : index
    %47 = vector.load %arg4[%c0_16, %c0_17, %c0_18] : memref<1x1x1xf32, #tpu.memory_space<vmem>>, vector<1x1x1xf32>
    %48 = vector.shape_cast %46 : vector<4x128xf32> to vector<1x4x128xf32>
    %cst_19 = arith.constant dense<0.000000e+00> : vector<1xf32>
    %49 = vector.multi_reduction <add>, %48, %cst_19 [1, 2] : vector<1x4x128xf32> to vector<1xf32>
    %50 = vector.shape_cast %49 : vector<1xf32> to vector<1x1x1xf32>
    %51 = vector.extract %50[0, 0, 0] : f32 from vector<1x1x1xf32>
    %52 = vector.broadcast %51 : f32 to vector<1x1x1xf32>
    %53 = arith.addf %47, %52 : vector<1x1x1xf32>
    %c0_20 = arith.constant 0 : index
    %c0_21 = arith.constant 0 : index
    %c0_22 = arith.constant 0 : index
    %54 = vector.load %arg4[%c0_20, %c0_21, %c0_22] : memref<1x1x1xf32, #tpu.memory_space<vmem>>, vector<1x1x1xf32>
    tpu.vector_store %arg4[%c0_20, %c0_21, %c0_22], %53 {strides = array<i32>} : memref<1x1x1xf32, #tpu.memory_space<vmem>>, vector<1x1x1xf32>,
    %cst_23 = arith.constant 1.000000e+00 : f32
    %55 = vector.broadcast %cst_23 : f32 to vector<4x128xf32>
    %56 = arith.divf %55, %28 : vector<4x128xf32>
    %cst_24 = arith.constant dense<0.000000e+00> : vector<128xf32>
    %57 = vector.multi_reduction <add>, %56, %cst_24 [0] : vector<4x128xf32> to vector<128xf32>
    %58 = vector.shape_cast %57 : vector<128xf32> to vector<1x128xf32>
    %59 = vector.broadcast %58 : vector<1x128xf32> to vector<4x128xf32>
    %60 = arith.divf %56, %59 : vector<4x128xf32>
    %c0_i32_25 = arith.constant 0 : i32
    %c3_i32 = arith.constant 3 : i32
    %61 = vector.broadcast %c0_i32_25 : i32 to vector<1x128xi32>
    %62 = arith.maxsi %61, %6 : vector<1x128xi32>
    %63 = vector.broadcast %c3_i32 : i32 to vector<1x128xi32>
    %64 = arith.minsi %63, %62 : vector<1x128xi32>
    %65 = vector.broadcast %64 : vector<1x128xi32> to vector<4x128xi32>
    %66 = arith.cmpi eq, %16, %65 : vector<4x128xi32>
    %c0_26 = arith.constant 0 : index
    %c0_27 = arith.constant 0 : index
    %67 = vector.load %arg6[%c0_26, %c0_27] : memref<4x1xf32, #tpu.memory_space<vmem>>, vector<4x1xf32>
    %68 = vector.broadcast %18 : vector<1x128xi1> to vector<4x128xi1>
    %69 = arith.andi %66, %68 : vector<4x128xi1>
    %cst_28 = arith.constant 0.000000e+00 : f32
    %70 = vector.broadcast %cst_28 : f32 to vector<4x128xf32>
    %71 = arith.select %69, %60, %70 : vector<4x128xi1>, vector<4x128xf32>
    %cst_29 = arith.constant dense<0.000000e+00> : vector<4xf32>
    %72 = vector.multi_reduction <add>, %71, %cst_29 [1] : vector<4x128xf32> to vector<4xf32>
    %73 = vector.shape_cast %72 : vector<4xf32> to vector<4x1xf32>
    %74 = arith.addf %67, %73 : vector<4x1xf32>
    %c0_30 = arith.constant 0 : index
    %c0_31 = arith.constant 0 : index
    %75 = vector.load %arg6[%c0_30, %c0_31] : memref<4x1xf32, #tpu.memory_space<vmem>>, vector<4x1xf32>
    tpu.vector_store %arg6[%c0_30, %c0_31], %74 {strides = array<i32>} : memref<4x1xf32, #tpu.memory_space<vmem>>, vector<4x1xf32>,
    %c0_32 = arith.constant 0 : index
    %c0_33 = arith.constant 0 : index
    %76 = vector.load %arg7[%c0_32, %c0_33] : memref<4x1xf32, #tpu.memory_space<vmem>>, vector<4x1xf32>
    %77 = arith.mulf %60, %60 : vector<4x128xf32>
    %cst_34 = arith.constant 1.000000e+00 : f32
    %cst_35 = arith.constant 0.000000e+00 : f32
    %78 = vector.broadcast %cst_34 : f32 to vector<4x128xf32>
    %79 = vector.broadcast %cst_35 : f32 to vector<4x128xf32>
    %80 = arith.select %66, %78, %79 : vector<4x128xi1>, vector<4x128xf32>
    %81 = arith.addf %77, %80 : vector<4x128xf32>
    %cst_36 = arith.constant dense<0.000000e+00> : vector<4xf32>
    %82 = vector.multi_reduction <add>, %81, %cst_36 [1] : vector<4x128xf32> to vector<4xf32>
    %83 = vector.shape_cast %82 : vector<4xf32> to vector<4x1xf32>
    %84 = arith.addf %76, %83 : vector<4x1xf32>
    %c0_37 = arith.constant 0 : index
    %c0_38 = arith.constant 0 : index
    %85 = vector.load %arg7[%c0_37, %c0_38] : memref<4x1xf32, #tpu.memory_space<vmem>>, vector<4x1xf32>
    tpu.vector_store %arg7[%c0_37, %c0_38], %84 {strides = array<i32>} : memref<4x1xf32, #tpu.memory_space<vmem>>, vector<4x1xf32>,
    %c1_i32 = arith.constant 1 : i32
    %86 = arith.cmpi eq, %arg1, %c1_i32 : i32
    %87 = arith.extui %86 : i1 to i32
    %c0_i32_39 = arith.constant 0 : i32
    %88 = arith.cmpi ne, %87, %c0_i32_39 : i32
    scf.if %88 {
      %c0_40 = arith.constant 0 : index
      %c0_41 = arith.constant 0 : index
      %89 = vector.load %arg6[%c0_40, %c0_41] : memref<4x1xf32, #tpu.memory_space<vmem>>, vector<4x1xf32>
      %cst_42 = arith.constant 2.000000e+00 : f32
      %90 = vector.broadcast %cst_42 : f32 to vector<4x1xf32>
      %91 = arith.mulf %90, %89 : vector<4x1xf32>
      %cst_43 = arith.constant 1.000000e+00 : f32
      %92 = vector.broadcast %cst_43 : f32 to vector<4x1xf32>
      %93 = arith.addf %91, %92 : vector<4x1xf32>
      %c0_44 = arith.constant 0 : index
      %c0_45 = arith.constant 0 : index
      %94 = vector.load %arg7[%c0_44, %c0_45] : memref<4x1xf32, #tpu.memory_space<vmem>>, vector<4x1xf32>
      %cst_46 = arith.constant 1.000000e+00 : f32
      %95 = vector.broadcast %cst_46 : f32 to vector<4x1xf32>
      %96 = arith.addf %94, %95 : vector<4x1xf32>
      %97 = arith.divf %93, %96 : vector<4x1xf32>
      %cst_47 = arith.constant 1.000000e+00 : f32
      %98 = vector.broadcast %cst_47 : f32 to vector<4x1xf32>
      %99 = arith.subf %98, %97 : vector<4x1xf32>
      %100 = vector.shape_cast %99 : vector<4x1xf32> to vector<1x4x1xf32>
      %cst_48 = arith.constant dense<0.000000e+00> : vector<1xf32>
      %101 = vector.multi_reduction <add>, %100, %cst_48 [1, 2] : vector<1x4x1xf32> to vector<1xf32>
      %102 = vector.shape_cast %101 : vector<1xf32> to vector<1x1x1xf32>
      %103 = vector.extract %102[0, 0, 0] : f32 from vector<1x1x1xf32>
      %104 = vector.broadcast %103 : f32 to vector<1x1x1xf32>
      %c0_49 = arith.constant 0 : index
      %c0_50 = arith.constant 0 : index
      %c0_51 = arith.constant 0 : index
      %105 = vector.load %arg5[%c0_49, %c0_50, %c0_51] : memref<1x1x1xf32, #tpu.memory_space<vmem>>, vector<1x1x1xf32>
      tpu.vector_store %arg5[%c0_49, %c0_50, %c0_51], %104 {strides = array<i32>} : memref<1x1x1xf32, #tpu.memory_space<vmem>>, vector<1x1x1xf32>,
    } else {
    }
    return
  }
  func.func @transform_0(%arg0: i32, %arg1: i32) -> (i32, i32, i32) {
    %c0_i32 = arith.constant 0 : i32
    %c0_i32_0 = arith.constant 0 : i32
    return %arg0, %c0_i32, %arg1 : i32, i32, i32
  }
  func.func @transform_1(%arg0: i32, %arg1: i32) -> (i32, i32, i32) {
    %c0_i32 = arith.constant 0 : i32
    %c0_i32_0 = arith.constant 0 : i32
    return %arg0, %c0_i32, %arg1 : i32, i32, i32
  }
  func.func @transform_2(%arg0: i32, %arg1: i32) -> (i32, i32, i32) {
    %c0_i32 = arith.constant 0 : i32
    %c0_i32_0 = arith.constant 0 : i32
    %c0_i32_1 = arith.constant 0 : i32
    return %arg0, %c0_i32, %c0_i32_0 : i32, i32, i32
  }
  func.func @transform_3(%arg0: i32, %arg1: i32) -> (i32, i32, i32) {
    %c0_i32 = arith.constant 0 : i32
    %c0_i32_0 = arith.constant 0 : i32
    %c0_i32_1 = arith.constant 0 : i32
    return %arg0, %c0_i32, %c0_i32_0 : i32, i32, i32
  }
}

</mosaic_0001>

<llo_original>
// kernel: focal_dice_loss.1
$region0: #{focal_dice_loss.1}
  #allocation0 [shape = 'u32[]', space=smem, size = 0x4, offset = 0x4, fixed_abs, tag = 'smem constant byte address 0x4 - core index']
  #allocation1 [shape = 'u32[144,128]{1,0:T(1,128)}', space=vmem, size = 0x12000, scoped, tag = 'internal scratch']
  #allocation2 [shape = 'f32[4,1]{1,0:T(4,128)}', space=vmem, size = 0x800, scoped, tag = 'scratch operand']
  #allocation3 [shape = 'f32[4,1]{1,0:T(4,128)}', space=vmem, size = 0x800, scoped, tag = 'scratch operand']
  %s0 = inlined_call_operand.vmem [shape: f32[2,4,256], index: 0, kind: input, shape index: {}]
  %s1 = inlined_call_operand.vmem [shape: s32[2,1,256], index: 1, kind: input, shape index: {}]
  %s2 = inlined_call_operand.vmem [shape: f32[2,1,1], index: 2, kind: output, shape index: {0}]
  %s3 = inlined_call_operand.vmem [shape: f32[2,1,1], index: 3, kind: output, shape index: {1}]
  %4 = xla_tuple %s2, %s3
  %s5 = sld [smem:[#allocation0]]
  $region57: #{focal_dice_loss.1} parent=0
    _
  %s7 = ssub.s32 1, %s5
  %s8 = scalar_select 0, %s7, %s5
  loop: start=0, step=1, limit=6
  $region2: #{focal_dice_loss.1} parent=0 // loop_pre_header
    _
  $region3: #{focal_dice_loss.1} parent=0 // loop_header
    %s10 = sphi 0, %s14
    %p11 = scmp.ge.s32.totalorder %s10, 6
    %s17 = sphi 0, %s29
    %s18 = sphi 0, %s25
    %s19 = sphi 0, %s17
    %s20 = sphi 0, %s18
    %s21 = sphi 0, %s19
    %s22 = sphi 0, %s20
    %s34 = sphi 0, %s36
    %s37 = sphi 0, %s34
    %s38 = sphi 0, %s37
    %s54 = sphi 0, %s38
    %s62 = sphi 0, %s64
    %s65 = sphi 0, %s62
    %s66 = sphi 0, %s65
    %s82 = sphi 0, %s66
    %s88 = sphi 0, %s90
    %s91 = sphi 0, %s88
    %s92 = sphi 0, %s91
    %s108 = sphi 0, %s92
    %s114 = sphi 0, %s116
    %s117 = sphi 0, %s114
    %s118 = sphi 0, %s117
    %s134 = sphi 0, %s118
  $region4: #{focal_dice_loss.1} parent=0 // loop_header_branch
    %13 = sbr.rel (%p11) target = $region8
  $region5: #{focal_dice_loss.1} parent=0 // loop_body
    %s15 = ssub.s32 %s10, 1
    %s16 = ssub.s32 %s10, 2
    %s23 = sadd.s32 1, %s18
    %p24 = scmp.ge.s32.totalorder %s23, 2
    %s25 = scalar_select %p24, 0, %s23
    %s26 = sadd.s32 1, %s17
    %s27 = scalar_select %p24, %s26, %s17
    %p28 = scmp.ge.s32.totalorder %s27, 2
    %s29 = scalar_select %p28, 0, %s27
    %s30 = ssub.s32 %s17, %s29
    %s31 = ssub.s32 %s18, %s25
    %s32 = sor.u32 %s30, %s31
    %p33 = scmp.eq.s32.totalorder %s32, 0
    %s35 = sadd.s32 %s34, 1
    %s36 = scalar_select %p33, %s34, %s35
    %p39 = pneg %p33
    %p40 = scmp.eq.s32.totalorder %s10, 3
    %p41 = por %p39, %p40
    %p42 = scmp.ne.s32.totalorder %s34, %s37
    %p43 = scmp.eq.s32.totalorder %s10, 0
    %p44 = por %p42, %p43
    %p45 = scmp.ne.s32.totalorder %s34, %s37
    %p46 = scmp.eq.s32.totalorder %s15, 3
    %p47 = por %p45, %p46
    %p48 = scmp.ne.s32.totalorder %s37, %s38
    %p49 = scmp.eq.s32.totalorder %s15, 0
    %p50 = por %p48, %p49
    %p51 = scmp.ne.s32.totalorder %s37, %s38
    %p52 = scmp.eq.s32.totalorder %s16, 3
    %p53 = por %p51, %p52
    %p55 = scmp.ne.s32.totalorder %s38, %s54
    %p56 = scmp.eq.s32.totalorder %s16, 0
    %p57 = por %p55, %p56
    %s58 = ssub.s32 %s17, %s29
    %s59 = ssub.s32 %s18, %s25
    %s60 = sor.u32 %s58, %s59
    %p61 = scmp.eq.s32.totalorder %s60, 0
    %s63 = sadd.s32 %s62, 1
    %s64 = scalar_select %p61, %s62, %s63
    %p67 = pneg %p61
    %p68 = scmp.eq.s32.totalorder %s10, 3
    %p69 = por %p67, %p68
    %p70 = scmp.ne.s32.totalorder %s62, %s65
    %p71 = scmp.eq.s32.totalorder %s10, 0
    %p72 = por %p70, %p71
    %p73 = scmp.ne.s32.totalorder %s62, %s65
    %p74 = scmp.eq.s32.totalorder %s15, 3
    %p75 = por %p73, %p74
    %p76 = scmp.ne.s32.totalorder %s65, %s66
    %p77 = scmp.eq.s32.totalorder %s15, 0
    %p78 = por %p76, %p77
    %p79 = scmp.ne.s32.totalorder %s65, %s66
    %p80 = scmp.eq.s32.totalorder %s16, 3
    %p81 = por %p79, %p80
    %p83 = scmp.ne.s32.totalorder %s66, %s82
    %p84 = scmp.eq.s32.totalorder %s16, 0
    %p85 = por %p83, %p84
    %s86 = ssub.s32 %s17, %s29
    %p87 = scmp.eq.s32.totalorder %s86, 0
    %s89 = sadd.s32 %s88, 1
    %s90 = scalar_select %p87, %s88, %s89
    %p93 = pneg %p87
    %p94 = scmp.eq.s32.totalorder %s10, 3
    %p95 = por %p93, %p94
    %p96 = scmp.ne.s32.totalorder %s88, %s91
    %p97 = scmp.eq.s32.totalorder %s10, 0
    %p98 = por %p96, %p97
    %p99 = scmp.ne.s32.totalorder %s88, %s91
    %p100 = scmp.eq.s32.totalorder %s15, 3
    %p101 = por %p99, %p100
    %p102 = scmp.ne.s32.totalorder %s91, %s92
    %p103 = scmp.eq.s32.totalorder %s15, 0
    %p104 = por %p102, %p103
    %p105 = scmp.ne.s32.totalorder %s91, %s92
    %p106 = scmp.eq.s32.totalorder %s16, 3
    %p107 = por %p105, %p106
    %p109 = scmp.ne.s32.totalorder %s92, %s108
    %p110 = scmp.eq.s32.totalorder %s16, 0
    %p111 = por %p109, %p110
    %s112 = ssub.s32 %s17, %s29
    %p113 = scmp.eq.s32.totalorder %s112, 0
    %s115 = sadd.s32 %s114, 1
    %s116 = scalar_select %p113, %s114, %s115
    %p119 = pneg %p113
    %p120 = scmp.eq.s32.totalorder %s10, 3
    %p121 = por %p119, %p120
    %p122 = scmp.ne.s32.totalorder %s114, %s117
    %p123 = scmp.eq.s32.totalorder %s10, 0
    %p124 = por %p122, %p123
    %p125 = scmp.ne.s32.totalorder %s114, %s117
    %p126 = scmp.eq.s32.totalorder %s15, 3
    %p127 = por %p125, %p126
    %p128 = scmp.ne.s32.totalorder %s117, %s118
    %p129 = scmp.eq.s32.totalorder %s15, 0
    %p130 = por %p128, %p129
    %p131 = scmp.ne.s32.totalorder %s117, %s118
    %p132 = scmp.eq.s32.totalorder %s16, 3
    %p133 = por %p131, %p132
    %p135 = scmp.ne.s32.totalorder %s118, %s134
    %p136 = scmp.eq.s32.totalorder %s16, 0
    %p137 = por %p135, %p136
    %p138 = scmp.le.s32.totalorder 1, %s10
    %p139 = scmp.lt.s32.totalorder %s10, 5
    %p140 = pnand %p138, %p139
    %p141 = pneg %p140
    // Predicated region
    $region9: #{focal_dice_loss.1} parent=5 // pred_check
      _
    $region10: #{focal_dice_loss.1} parent=5 // pred_check_branch
      %143 = sbr.rel (%p140) target = $region12
    $region11: #{focal_dice_loss.1} parent=5 // pred_region
      %s144 = ssub.s32 %s10, 1
    $region12: #{focal_dice_loss.1} parent=5 // pred_fallthru
      _
    %p145 = scmp.lt.s32.totalorder %s10, 4
    // Predicated region
    $region13: #{focal_dice_loss.1} parent=5 // pred_check
      %p146 = pneg %p145
    $region14: #{focal_dice_loss.1} parent=5 // pred_check_branch
      %148 = sbr.rel (%p146) target = $region16
    $region15: #{focal_dice_loss.1} parent=5 // pred_region
      // Predicated region
      $region17: #{focal_dice_loss.1} parent=15 // pred_check
        %p149 = pneg %p44
      $region18: #{focal_dice_loss.1} parent=15 // pred_check_branch
        %151 = sbr.rel (%p149) target = $region20
      $region19: #{focal_dice_loss.1} parent=15 // pred_region
        %p152 = scmp.lt.s32.totalorder %s17, 1
        %s153 = scalar_select %p152, %s17, 1
        %p154 = scmp.lt.s32.totalorder %s18, 1
        %s155 = scalar_select %p154, %s18, 1
        %s156 = smul.addr %s153, 2
        %s157 = sadd.s32 %s155, %s156
        %s158 = smul.addr %s157, 4
        %s159 = scalar_lea.vmem %s0, %s158
      $region20: #{focal_dice_loss.1} parent=15 // pred_fallthru
        _
      // Predicated region
      $region21: #{focal_dice_loss.1} parent=15 // pred_check
        %p160 = pneg %p72
      $region22: #{focal_dice_loss.1} parent=15 // pred_check_branch
        %162 = sbr.rel (%p160) target = $region24
      $region23: #{focal_dice_loss.1} parent=15 // pred_region
        %p163 = scmp.lt.s32.totalorder %s17, 1
        %s164 = scalar_select %p163, %s17, 1
        %p165 = scmp.lt.s32.totalorder %s18, 1
        %s166 = scalar_select %p165, %s18, 1
        %s167 = smul.addr %s164, 2
        %s168 = sadd.s32 %s166, %s167
        %s169 = scalar_lea.vmem %s1, %s168
      $region24: #{focal_dice_loss.1} parent=15 // pred_fallthru
        _
    $region16: #{focal_dice_loss.1} parent=5 // pred_fallthru
      _
    %p170 = scmp.le.s32.totalorder 1, %s10
    %p171 = scmp.lt.s32.totalorder %s10, 5
    %p172 = pnand %p170, %p171
    %p173 = pneg %p172
    // Predicated region
    $region25: #{focal_dice_loss.1} parent=5 // pred_check
      _
    $region26: #{focal_dice_loss.1} parent=5 // pred_check_branch
      %175 = sbr.rel (%p172) target = $region28
    $region27: #{focal_dice_loss.1} parent=5 // pred_region
      %s176 = ssub.s32 %s10, 1
      %p177 = scmp.lt.s32.totalorder %s19, 1
      %s178 = scalar_select %p177, %s19, 1
      %p179 = scmp.lt.s32.totalorder %s20, 1
      %s180 = scalar_select %p179, %s20, 1
      %s181 = smul.addr %s178, 2
      %s182 = sadd.s32 %s180, %s181
      %s183 = smul.addr %s182, 4
      %s184 = scalar_lea.vmem %s0, %s183
      %p185 = pneg %p50
      %p186 = pneg %p47
      %p187 = scmp.lt.s32.totalorder %s19, 1
      %s188 = scalar_select %p187, %s19, 1
      %p189 = scmp.lt.s32.totalorder %s20, 1
      %s190 = scalar_select %p189, %s20, 1
      %s191 = smul.addr %s188, 2
      %s192 = sadd.s32 %s190, %s191
      %s193 = scalar_lea.vmem %s1, %s192
      %p194 = pneg %p78
      %p195 = pneg %p75
      %p196 = pneg %p104
      %p197 = pneg %p101
      %p198 = scmp.lt.s32.totalorder %s19, 1
      %s199 = scalar_select %p198, %s19, 1
      %s200 = scalar_lea.vmem %s2, %s199
      %p201 = pneg %p130
      %p202 = pneg %p127
      %p203 = scmp.lt.s32.totalorder %s19, 1
      %s204 = scalar_select %p203, %s19, 1
      %s205 = scalar_lea.vmem %s3, %s204
      %p206 = scmp.lt.s32.totalorder %s19, 1
      %s207 = scalar_select %p206, %s19, 1
      %p208 = scmp.lt.s32.totalorder %s20, 1
      %s209 = scalar_select %p208, %s20, 1
      %s210 = smul.addr %s207, 2
      %s211 = sadd.s32 %s209, %s210
      %s212 = smul.addr %s211, 4
      %s213 = scalar_lea.vmem %s0, %s212
      %p214 = scmp.lt.s32.totalorder %s19, 1
      %s215 = scalar_select %p214, %s19, 1
      %p216 = scmp.lt.s32.totalorder %s20, 1
      %s217 = scalar_select %p216, %s20, 1
      %s218 = smul.addr %s215, 2
      %s219 = sadd.s32 %s217, %s218
      %s220 = scalar_lea.vmem %s1, %s219
      %p221 = scmp.lt.s32.totalorder %s19, 1
      %s222 = scalar_select %p221, %s19, 1
      %s223 = scalar_lea.vmem %s2, %s222
      %p224 = scmp.lt.s32.totalorder %s19, 1
      %s225 = scalar_select %p224, %s19, 1
      %s226 = scalar_lea.vmem %s3, %s225
      %p227 = scmp.eq.s32.totalorder %s20, 0
      // Predicated region
      $region29: #{focal_dice_loss.1} parent=27 // pred_check
        %p228 = pneg %p227
      $region30: #{focal_dice_loss.1} parent=27 // pred_check_branch
        %230 = sbr.rel (%p228) target = $region32
      $region31: #{focal_dice_loss.1} parent=27 // pred_region
        %vm231 = vcmask 0
        %232 = vst.msk [vmem:[%s223] sm:$0x1] %vm231, 0.0
        %vm233 = vcmask 3072
        %234 = vst.msk [vmem:[#allocation2] sm:$0xf] %vm233, 0.0
        %235 = vst.msk [vmem:[#allocation3] sm:$0xf] %vm233, 0.0
      $region32: #{focal_dice_loss.1} parent=27 // pred_fallthru
        _
      %v236 = vld [vmem:[%s213] sm:$0xf]
      %v237 = vld [vmem:[%s220] sm:$0x1]
      %vm238 = vcmask 1043456
      %v239 = vsel %vm238, %v236, -inf
      %v240 = vrot.slane %v239, 4
      %v241 = vmax.f32 %v239, %v240
      %v242 = vrot.slane %v241, 2
      %v243 = vmax.f32 %v241, %v242
      %v244 = vrot.slane %v243, 1
      %v245 = vmax.f32 %v243, %v244
      %v246 = vsub.f32 %v236, %v245
      %v247 = vmul.f32 %v246, 1.442695
      %v248 = vpow.pop %v247
      %v249 = vsel %vm238, %v248, 0.0
      %v250 = vrot.slane %v249, 4
      %v251 = vadd.f32 %v249, %v250
      %v252 = vrot.slane %v251, 2
      %v253 = vadd.f32 %v251, %v252
      %v254 = vrot.slane %v253, 1
      %v255 = vadd.f32 %v253, %v254
      %v256 = vrcp.pop %v255
      %v257 = vmul.f32 %v248, %v256
      %v258 = vlaneseq
      %v259 = vshrl.u32 %v258, 7
      %vm260 = vcmp.ne.s32.totalorder %v237, 255
      %vm261 = vcmp.ge.s32.totalorder %v237, 0
      %vm262 = vmand %vm261, %vm260
      %v263 = vlaneseq
      %v264 = vshrl.u32 %v263, 7
      %v265 = vsub.s32 0, %v264
      %v266 = vrot.slane %v237, %v265
      %vm267 = vcmp.eq.s32.totalorder %v259, %v266
      %v268 = vsel %vm262, 1, 0
      %v269 = vlaneseq
      %v270 = vshrl.u32 %v269, 7
      %v271 = vsub.s32 0, %v270
      %v272 = vrot.slane %v268, %v271
      %vm273 = vcmp.eq.s32.totalorder %v272, 1
      %vm274 = vmand %vm267, %vm273
      %v275 = vsub.f32 0.0, %v257
      %v276 = vmul.f32 %v275, 1.442695
      %v277 = vpow.pop %v276
      %v278 = vadd.f32 %v277, 1.0
      %v279 = vrcp.pop %v278
      %v280 = vmul.f32 1.0, %v279
      %v281 = vsub.f32 1.0, %v280
      %v282 = vsel %vm274, %v280, %v281
      %v283 = vlog2.pop %v282
      %v284 = vmul.f32 %v283, 0.6931472
      %v285 = vsub.f32 0.0, %v284
      %v286 = vsub.f32 1.0, %v282
      %v287 = vsel %vm274, 0.25, 0.75
      %v288 = vmul.f32 %v286, %v286
      %v289 = vmul.f32 %v288, %v285
      %v290 = vmul.f32 %v289, %v287
      %v291 = vld [vmem:[%s223] sm:$0x1]
      %v292 = vsel %vm238, %v290, 0.0
      %293 = vadd.xlane.f32.xlu0 %v292
      %v294 = vpop.xlane.xlu0 %293
      %v295 = vrot.slane %v294, 4
      %v296 = vadd.f32 %v294, %v295
      %v297 = vrot.slane %v296, 2
      %v298 = vadd.f32 %v296, %v297
      %v299 = vrot.slane %v298, 1
      %v300 = vadd.f32 %v298, %v299
      %s301 = vtos %v300
      %v302 = vstv %s301
      %v303 = vadd.f32 %v291, %v302
      %vm304 = vcmask 0
      %305 = vst.msk [vmem:[%s223] sm:$0x1] %vm304, %v303
      %v306 = vrcp.pop %v277
      %v307 = vmul.f32 1.0, %v306
      %v308 = vsel %vm238, %v307, 0.0
      %v309 = vrot.slane %v308, 4
      %v310 = vadd.f32 %v308, %v309
      %v311 = vrot.slane %v310, 2
      %v312 = vadd.f32 %v310, %v311
      %v313 = vrot.slane %v312, 1
      %v314 = vadd.f32 %v312, %v313
      %v315 = vrcp.pop %v314
      %v316 = vmul.f32 %v307, %v315
      %vm317 = vcmp.gt.s32.totalorder %v237, 0
      %v318 = vsel %vm317, %v237, 0
      %vm319 = vcmp.lt.s32.totalorder %v318, 3
      %v320 = vsel %vm319, %v318, 3
      %v321 = vlaneseq
      %v322 = vshrl.u32 %v321, 7
      %v323 = vsub.s32 0, %v322
      %v324 = vrot.slane %v320, %v323
      %vm325 = vcmp.eq.s32.totalorder %v259, %v324
      %v326 = vld [vmem:[#allocation2] sm:$0xf]
      %v327 = vsel %vm260, 1, 0
      %v328 = vlaneseq
      %v329 = vshrl.u32 %v328, 7
      %v330 = vsub.s32 0, %v329
      %v331 = vrot.slane %v327, %v330
      %vm332 = vcmp.eq.s32.totalorder %v331, 1
      %vm333 = vmand %vm325, %vm332
      %v334 = vsel %vm333, %v316, 0.0
      %v335 = vsel %vm238, %v334, 0.0
      %336 = vadd.xlane.f32.xlu0 %v335
      %v337 = vpop.xlane.xlu0 %336
      %v338 = vadd.f32 %v326, %v337
      %vm339 = vcmask 3072
      %340 = vst.msk [vmem:[#allocation2] sm:$0xf] %vm339, %v338
      %v341 = vld [vmem:[#allocation3] sm:$0xf]
      %v342 = vmul.f32 %v316, %v316
      %v343 = vsel %vm325, 1.0, 0.0
      %v344 = vadd.f32 %v342, %v343
      %v345 = vsel %vm238, %v344, 0.0
      %346 = vadd.xlane.f32.xlu0 %v345
      %v347 = vpop.xlane.xlu0 %346
      %v348 = vadd.f32 %v341, %v347
      %349 = vst.msk [vmem:[#allocation3] sm:$0xf] %vm339, %v348
      %p350 = scmp.eq.s32.totalorder %s20, 1
      // Predicated region
      $region33: #{focal_dice_loss.1} parent=27 // pred_check
        %p351 = pneg %p350
      $region34: #{focal_dice_loss.1} parent=27 // pred_check_branch
        %353 = sbr.rel (%p351) target = $region36
      $region35: #{focal_dice_loss.1} parent=27 // pred_region
        %v354 = vld [vmem:[#allocation2] sm:$0xf]
        %v355 = vmul.f32 %v354, 2.0
        %v356 = vadd.f32 %v355, 1.0
        %v357 = vld [vmem:[#allocation3] sm:$0xf]
        %v358 = vadd.f32 %v357, 1.0
        %v359 = vrcp.pop %v358
        %v360 = vmul.f32 %v356, %v359
        %v361 = vsub.f32 1.0, %v360
        %v362 = vsel %vm339, %v361, 0.0
        %363 = vadd.xlane.f32.xlu0 %v362
        %v364 = vpop.xlane.xlu0 %363
        %v365 = vrot.slane %v364, 4
        %v366 = vadd.f32 %v364, %v365
        %v367 = vrot.slane %v366, 2
        %v368 = vadd.f32 %v366, %v367
        %v369 = vrot.slane %v368, 1
        %v370 = vadd.f32 %v368, %v369
        %s371 = vtos %v370
        %v372 = vstv %s371
        %373 = vst.msk [vmem:[%s226] sm:$0x1] %vm304, %v372
      $region36: #{focal_dice_loss.1} parent=27 // pred_fallthru
        _
      %p374 = scmp.lt.s32.totalorder %s19, 1
      %s375 = scalar_select %p374, %s19, 1
      %s376 = scalar_lea.vmem %s2, %s375
      %p377 = scmp.lt.s32.totalorder %s19, 1
      %s378 = scalar_select %p377, %s19, 1
      %s379 = scalar_lea.vmem %s3, %s378
      // Predicated region
      $region37: #{focal_dice_loss.1} parent=27 // pred_check
        %p380 = pneg %p101
      $region38: #{focal_dice_loss.1} parent=27 // pred_check_branch
        %382 = sbr.rel (%p380) target = $region40
      $region39: #{focal_dice_loss.1} parent=27 // pred_region
        _
      $region40: #{focal_dice_loss.1} parent=27 // pred_fallthru
        _
      // Predicated region
      $region41: #{focal_dice_loss.1} parent=27 // pred_check
        %p383 = pneg %p127
      $region42: #{focal_dice_loss.1} parent=27 // pred_check_branch
        %385 = sbr.rel (%p383) target = $region44
      $region43: #{focal_dice_loss.1} parent=27 // pred_region
        _
      $region44: #{focal_dice_loss.1} parent=27 // pred_fallthru
        _
    $region28: #{focal_dice_loss.1} parent=5 // pred_fallthru
      _
    %p386 = scmp.le.s32.totalorder 2, %s10
    // Predicated region
    $region45: #{focal_dice_loss.1} parent=5 // pred_check
      %p387 = pneg %p386
    $region46: #{focal_dice_loss.1} parent=5 // pred_check_branch
      %389 = sbr.rel (%p387) target = $region48
    $region47: #{focal_dice_loss.1} parent=5 // pred_region
      %s390 = ssub.s32 %s10, 2
      // Predicated region
      $region49: #{focal_dice_loss.1} parent=47 // pred_check
        %p391 = pneg %p107
      $region50: #{focal_dice_loss.1} parent=47 // pred_check_branch
        %393 = sbr.rel (%p391) target = $region52
      $region51: #{focal_dice_loss.1} parent=47 // pred_region
        %p394 = scmp.lt.s32.totalorder %s21, 1
        %s395 = scalar_select %p394, %s21, 1
        %s396 = scalar_lea.vmem %s2, %s395
      $region52: #{focal_dice_loss.1} parent=47 // pred_fallthru
        _
      // Predicated region
      $region53: #{focal_dice_loss.1} parent=47 // pred_check
        %p397 = pneg %p133
      $region54: #{focal_dice_loss.1} parent=47 // pred_check_branch
        %399 = sbr.rel (%p397) target = $region56
      $region55: #{focal_dice_loss.1} parent=47 // pred_region
        %p400 = scmp.lt.s32.totalorder %s21, 1
        %s401 = scalar_select %p400, %s21, 1
        %s402 = scalar_lea.vmem %s3, %s401
      $region56: #{focal_dice_loss.1} parent=47 // pred_fallthru
        _
    $region48: #{focal_dice_loss.1} parent=5 // pred_fallthru
      _
  $region6: #{focal_dice_loss.1} parent=0 // loop_footer
    %s14 = sadd.s32 1, %s10
  $region7: #{focal_dice_loss.1} parent=0 // loop_footer_branch
    %9 = sbr.rel target = $region3
  $region8: #{focal_dice_loss.1} parent=0 // loop_exit
    _

</llo_original>
